<compile_context>
chip_gen: v7x
topology: tpu7x:2x2x1
jax: 0.10.0
libtpu: 0.0.40
codegen_flags: <defaults>
</compile_context>

<pallas_src>
import functools

import numpy as np
import jax
import jax.numpy as jnp
from jax.experimental import pallas as pl
from jax.experimental.pallas import tpu as pltpu


# -------- fused nearest-x2 upsample + 3x3 SAME conv (sub-pixel 2x2 form) -----
def upsample_conv_kernel(x_ref, wv_ref, b_ref, o_ref, *, H, W, C, Cout):
    # x_ref : (1, C, H*W)       input sample, NCHW-flattened (lane-dense)
    # wv_ref: (9, 4*Cout, C)    bf16 phase-combined taps, row = (2a+b)*Cout + co
    # b_ref : (4*Cout, 1)       f32 bias, tiled over the 4 phases
    # o_ref : (1, 4*Cout, H*W)  phase-major output
    HW = H * W
    PAD = W + 1

    x = x_ref[0].astype(jnp.bfloat16)                         # (C, HW)
    zpad = jnp.zeros((C, PAD), jnp.bfloat16)
    xp = jnp.concatenate([zpad, x, zpad], axis=1)             # (C, HW + 2W + 2)

    # column index of every lane -- the only in-kernel index math, (1, HW)
    q = jax.lax.broadcasted_iota(jnp.int32, (1, HW), 1) % W

    acc = jnp.zeros((4 * Cout, HW), jnp.float32)
    for dr in (-1, 0, 1):
        for dc in (-1, 0, 1):
            s = dr * W + dc
            tap = xp[:, PAD + s:PAD + s + HW]                 # (C, HW) bf16
            if dc == -1:                                      # mask column wrap
                tap = jnp.where(q >= 1, tap, 0)
            elif dc == 1:
                tap = jnp.where(q < W - 1, tap, 0)
            acc = acc + jnp.dot(wv_ref[3 * (dr + 1) + (dc + 1)], tap,
                                preferred_element_type=jnp.float32)

    o_ref[0] = (acc + b_ref[...]).astype(o_ref.dtype)


# ------------------------ nearest-x2 upsample only ---------------------------
def upsample_kernel(x_ref, o_ref):
    # x_ref: (1, C, H*W) ; o_ref: (1, 4, C, H*W) -- 4 identical sub-pixel phases
    x = x_ref[0]
    for k in range(4):
        o_ref[0, k] = x


# -------------------------------- helpers ------------------------------------
def _phases_to_nchw(phases, N, C, H, W):
    # phases flat order = (n, a, b, c, p, q)  ->  out[n, c, 2p+a, 2q+b]
    out = phases.reshape(N, 2, 2, C, H, W)
    out = jnp.transpose(out, (0, 3, 4, 1, 5, 2))              # (N, C, H, 2, W, 2)
    return out.reshape(N, C, 2 * H, 2 * W)


# -------------------------------- wrapper ------------------------------------
@functools.partial(jax.jit, static_argnames=("with_conv",))
def upsample_forward(x_nchw, params, with_conv=True):
    N, C, H, W = x_nchw.shape
    HW = H * W
    x_flat = x_nchw.reshape(N, C, HW)                         # free reshape (NCHW)

    if with_conv:
        w = params["conv_w"]                                  # (3, 3, C, Cout) HWIO
        b = params["conv_b"]                                  # (Cout,)
        Cout = w.shape[-1]

        # grid-invariant sub-pixel weight combination (computed once, in wrapper)
        # rowsel[a, dr+1, kh] = 1  iff  floor((a + kh - 1) / 2) == dr
        rowsel = np.zeros((2, 3, 3), np.float32)
        for a in range(2):
            for kh in range(3):
                rowsel[a, (a + kh - 1) // 2 + 1, kh] = 1.0
        # V[a, b, dr+1, dc+1, ci, co]
        V = jnp.einsum("ark,bcl,klio->abrcio", rowsel, rowsel, w)
        # Wv[dr*3 + dc, (2a+b)*Cout + co, ci]
        wv = jnp.transpose(V, (2, 3, 0, 1, 5, 4)).reshape(9, 4 * Cout, C)
        wv = wv.astype(jnp.bfloat16)
        b4 = jnp.tile(b, 4).reshape(4 * Cout, 1).astype(jnp.float32)

        kernel = functools.partial(upsample_conv_kernel, H=H, W=W, C=C, Cout=Cout)
        phases = pl.pallas_call(
            kernel,
            out_shape=jax.ShapeDtypeStruct((N, 4 * Cout, HW), x_nchw.dtype),
            grid=(N,),
            in_specs=[pl.BlockSpec((1, C, HW), lambda n: (n, 0, 0)),
                      pl.BlockSpec((9, 4 * Cout, C), lambda n: (0, 0, 0)),
                      pl.BlockSpec((4 * Cout, 1), lambda n: (0, 0))],
            out_specs=pl.BlockSpec((1, 4 * Cout, HW), lambda n: (n, 0, 0)),
            compiler_params=pltpu.CompilerParams(
                dimension_semantics=("parallel",),
                vmem_limit_bytes=32 * 1024 * 1024),
        )(x_flat, wv, b4)
        return _phases_to_nchw(phases, N, Cout, H, W)

    phases = pl.pallas_call(
        upsample_kernel,
        out_shape=jax.ShapeDtypeStruct((N, 4, C, HW), x_nchw.dtype),
        grid=(N,),
        in_specs=[pl.BlockSpec((1, C, HW), lambda n: (n, 0, 0))],
        out_specs=pl.BlockSpec((1, 4, C, HW), lambda n: (n, 0, 0, 0)),
        compiler_params=pltpu.CompilerParams(
            dimension_semantics=("parallel",),
            vmem_limit_bytes=32 * 1024 * 1024),
    )(x_flat)
    return _phases_to_nchw(phases, N, C, H, W)


# -------------------------------- reference ----------------------------------
def reference_forward(x_nchw, params, with_conv=True):
    y = jnp.repeat(jnp.repeat(x_nchw, 2, axis=2), 2, axis=3)  # nearest x2
    if with_conv:
        y = jax.lax.conv_general_dilated(
            y, params["conv_w"], (1, 1), "SAME",
            dimension_numbers=("NCHW", "HWIO", "NCHW"),
            precision=jax.lax.Precision.HIGHEST)
        y = y + params["conv_b"][None, :, None, None]
    return y


# ----------------------------------- main ------------------------------------
if __name__ == "__main__":
    key = jax.random.PRNGKey(0)
    kx, kw, kb = jax.random.split(key, 3)
    N, C, H, W = 2, 8, 16, 16

    x = jax.random.normal(kx, (N, C, H, W), jnp.float32)      # NCHW like PyTorch
    params = dict(
        conv_w=0.1 * jax.random.normal(kw, (3, 3, C, C), jnp.float32),  # HWIO
        conv_b=0.1 * jax.random.normal(kb, (C,), jnp.float32),
    )

    # with_conv=True path (Upsample(C, with_conv=True))
    out_c = jax.block_until_ready(upsample_forward(x, params, with_conv=True))
    ref_c = jax.block_until_ready(reference_forward(x, params, with_conv=True))
    assert out_c.shape == (N, C, 2 * H, 2 * W)
    err_c = float(jnp.max(jnp.abs(out_c - ref_c)))
    # bf16 MXU inputs with f32 accumulation -> relaxed tolerance
    assert err_c < 2e-2, f"max abs err {err_c}"

    # with_conv=False path (pure nearest upsample, exact copy)
    out_u = jax.block_until_ready(upsample_forward(x, params, with_conv=False))
    ref_u = jax.block_until_ready(reference_forward(x, params, with_conv=False))
    assert out_u.shape == (N, C, 2 * H, 2 * W)
    err_u = float(jnp.max(jnp.abs(out_u - ref_u)))
    assert err_u < 1e-6, f"max abs err {err_u}"

    print("KERNEL_OK")
</pallas_src>

<mosaic_0001>
module attributes {stable_mosaic.version = 11 : i64} {
  func.func @upsample_conv_kernel(%arg0: i32, %arg1: memref<1x8x256xf32, #tpu.memory_space<vmem>>, %arg2: memref<9x32x8xbf16, #tpu.memory_space<vmem>>, %arg3: memref<32x1xf32, #tpu.memory_space<vmem>>, %arg4: memref<1x32x256xf32, #tpu.memory_space<vmem>>) attributes {dimension_semantics = [#tpu.dimension_semantics<parallel>], iteration_bounds = array<i64: 2>, scalar_prefetch = 0 : i64, scratch_operands = 0 : i64, tpu.core_type = #tpu.core_type<tc>, window_params = [{transform_indices = @transform_0, window_bounds = array<i64: 1, 8, 256>}, {pipeline_mode = #tpu.pipeline_mode<synchronous>, transform_indices = @transform_1, window_bounds = array<i64: 9, 32, 8>}, {pipeline_mode = #tpu.pipeline_mode<synchronous>, transform_indices = @transform_2, window_bounds = array<i64: 32, 1>}, {transform_indices = @transform_3, window_bounds = array<i64: 1, 32, 256>}]} {
    %c0 = arith.constant 0 : index
    %c0_0 = arith.constant 0 : index
    %c0_1 = arith.constant 0 : index
    %0 = vector.load %arg1[%c0, %c0_0, %c0_1] : memref<1x8x256xf32, #tpu.memory_space<vmem>>, vector<1x8x256xf32>
    %1 = vector.shape_cast %0 : vector<1x8x256xf32> to vector<8x256xf32>
    %2 = arith.truncf %1 : vector<8x256xf32> to vector<8x256xbf16>
    %cst = arith.constant 0.000000e+00 : bf16
    %3 = vector.broadcast %cst : bf16 to vector<8x17xbf16>
    %4 = tpu.concatenate %3, %2, %3 in 1 : vector<8x17xbf16>, vector<8x256xbf16>, vector<8x17xbf16> -> vector<8x290xbf16>
    %5 = tpu.iota {dimensions = array<i32: 1>} : vector<1x256xi32>
    %c16_i32 = arith.constant 16 : i32
    %c0_i32 = arith.constant 0 : i32
    %6 = arith.cmpi eq, %c16_i32, %c0_i32 : i32
    %c1_i32 = arith.constant 1 : i32
    %7 = arith.select %6, %c1_i32, %c16_i32 : i32
    %8 = vector.broadcast %7 : i32 to vector<1x256xi32>
    %9 = arith.remsi %5, %8 : vector<1x256xi32>
    %c0_i32_2 = arith.constant 0 : i32
    %10 = vector.broadcast %c0_i32_2 : i32 to vector<1x256xi32>
    %11 = arith.cmpi ne, %9, %10 : vector<1x256xi32>
    %c0_i32_3 = arith.constant 0 : i32
    %12 = vector.broadcast %c0_i32_3 : i32 to vector<1x256xi32>
    %13 = arith.cmpi slt, %9, %12 : vector<1x256xi32>
    %c0_i32_4 = arith.constant 0 : i32
    %14 = arith.cmpi slt, %7, %c0_i32_4 : i32
    %15 = vector.broadcast %14 : i1 to vector<1x256xi1>
    %16 = vector.broadcast %15 : vector<1x256xi1> to vector<1x256xi1>
    %17 = arith.xori %13, %16 : vector<1x256xi1>
    %18 = arith.andi %17, %11 : vector<1x256xi1>
    %19 = vector.broadcast %7 : i32 to vector<1x256xi32>
    %20 = arith.addi %9, %19 : vector<1x256xi32>
    %21 = arith.select %18, %20, %9 : vector<1x256xi1>, vector<1x256xi32>
    %cst_5 = arith.constant 0.000000e+00 : f32
    %22 = vector.broadcast %cst_5 : f32 to vector<32x256xf32>
    %23 = vector.extract_strided_slice %4 {offsets = [0, 0], sizes = [8, 256], strides = [1, 1]} : vector<8x290xbf16> to vector<8x256xbf16>
    %c1_i32_6 = arith.constant 1 : i32
    %24 = vector.broadcast %c1_i32_6 : i32 to vector<1x256xi32>
    %25 = arith.cmpi sge, %21, %24 : vector<1x256xi32>
    %c0_i32_7 = arith.constant 0 : i32
    %26 = arith.sitofp %c0_i32_7 : i32 to bf16
    %27 = vector.shape_cast %25 : vector<1x256xi1> to vector<1x256xi1>
    %28 = vector.broadcast %27 : vector<1x256xi1> to vector<8x256xi1>
    %29 = vector.broadcast %26 : bf16 to vector<8x256xbf16>
    %30 = arith.select %28, %23, %29 : vector<8x256xi1>, vector<8x256xbf16>
    %c0_8 = arith.constant 0 : index
    %c0_9 = arith.constant 0 : index
    %c0_10 = arith.constant 0 : index
    %31 = vector.load %arg2[%c0_8, %c0_9, %c0_10] : memref<9x32x8xbf16, #tpu.memory_space<vmem>>, vector<1x32x8xbf16>
    %32 = vector.shape_cast %31 : vector<1x32x8xbf16> to vector<32x8xbf16>
    %cst_11 = arith.constant dense<0.000000e+00> : vector<32x256xf32>
    %33 = tpu.matmul %32, %30, %cst_11 {dimension_numbers = #tpu.dot_dimension_numbers<[1], [0], [0], [1], [0, 0, 1, 1], [], []>} : vector<32x8xbf16>, vector<8x256xbf16>, vector<32x256xf32> -> vector<32x256xf32>
    %34 = arith.addf %22, %33 : vector<32x256xf32>
    %35 = vector.extract_strided_slice %4 {offsets = [0, 1], sizes = [8, 256], strides = [1, 1]} : vector<8x290xbf16> to vector<8x256xbf16>
    %c1 = arith.constant 1 : index
    %c0_12 = arith.constant 0 : index
    %c0_13 = arith.constant 0 : index
    %36 = vector.load %arg2[%c1, %c0_12, %c0_13] : memref<9x32x8xbf16, #tpu.memory_space<vmem>>, vector<1x32x8xbf16>
    %37 = vector.shape_cast %36 : vector<1x32x8xbf16> to vector<32x8xbf16>
    %cst_14 = arith.constant dense<0.000000e+00> : vector<32x256xf32>
    %38 = tpu.matmul %37, %35, %cst_14 {dimension_numbers = #tpu.dot_dimension_numbers<[1], [0], [0], [1], [0, 0, 1, 1], [], []>} : vector<32x8xbf16>, vector<8x256xbf16>, vector<32x256xf32> -> vector<32x256xf32>
    %39 = arith.addf %34, %38 : vector<32x256xf32>
    %40 = vector.extract_strided_slice %4 {offsets = [0, 2], sizes = [8, 256], strides = [1, 1]} : vector<8x290xbf16> to vector<8x256xbf16>
    %c15_i32 = arith.constant 15 : i32
    %41 = vector.broadcast %c15_i32 : i32 to vector<1x256xi32>
    %42 = arith.cmpi slt, %21, %41 : vector<1x256xi32>
    %c0_i32_15 = arith.constant 0 : i32
    %43 = arith.sitofp %c0_i32_15 : i32 to bf16
    %44 = vector.shape_cast %42 : vector<1x256xi1> to vector<1x256xi1>
    %45 = vector.broadcast %44 : vector<1x256xi1> to vector<8x256xi1>
    %46 = vector.broadcast %43 : bf16 to vector<8x256xbf16>
    %47 = arith.select %45, %40, %46 : vector<8x256xi1>, vector<8x256xbf16>
    %c2 = arith.constant 2 : index
    %c0_16 = arith.constant 0 : index
    %c0_17 = arith.constant 0 : index
    %48 = vector.load %arg2[%c2, %c0_16, %c0_17] : memref<9x32x8xbf16, #tpu.memory_space<vmem>>, vector<1x32x8xbf16>
    %49 = vector.shape_cast %48 : vector<1x32x8xbf16> to vector<32x8xbf16>
    %cst_18 = arith.constant dense<0.000000e+00> : vector<32x256xf32>
    %50 = tpu.matmul %49, %47, %cst_18 {dimension_numbers = #tpu.dot_dimension_numbers<[1], [0], [0], [1], [0, 0, 1, 1], [], []>} : vector<32x8xbf16>, vector<8x256xbf16>, vector<32x256xf32> -> vector<32x256xf32>
    %51 = arith.addf %39, %50 : vector<32x256xf32>
    %52 = vector.extract_strided_slice %4 {offsets = [0, 16], sizes = [8, 256], strides = [1, 1]} : vector<8x290xbf16> to vector<8x256xbf16>
    %c1_i32_19 = arith.constant 1 : i32
    %53 = vector.broadcast %c1_i32_19 : i32 to vector<1x256xi32>
    %54 = arith.cmpi sge, %21, %53 : vector<1x256xi32>
    %c0_i32_20 = arith.constant 0 : i32
    %55 = arith.sitofp %c0_i32_20 : i32 to bf16
    %56 = vector.shape_cast %54 : vector<1x256xi1> to vector<1x256xi1>
    %57 = vector.broadcast %56 : vector<1x256xi1> to vector<8x256xi1>
    %58 = vector.broadcast %55 : bf16 to vector<8x256xbf16>
    %59 = arith.select %57, %52, %58 : vector<8x256xi1>, vector<8x256xbf16>
    %c3 = arith.constant 3 : index
    %c0_21 = arith.constant 0 : index
    %c0_22 = arith.constant 0 : index
    %60 = vector.load %arg2[%c3, %c0_21, %c0_22] : memref<9x32x8xbf16, #tpu.memory_space<vmem>>, vector<1x32x8xbf16>
    %61 = vector.shape_cast %60 : vector<1x32x8xbf16> to vector<32x8xbf16>
    %cst_23 = arith.constant dense<0.000000e+00> : vector<32x256xf32>
    %62 = tpu.matmul %61, %59, %cst_23 {dimension_numbers = #tpu.dot_dimension_numbers<[1], [0], [0], [1], [0, 0, 1, 1], [], []>} : vector<32x8xbf16>, vector<8x256xbf16>, vector<32x256xf32> -> vector<32x256xf32>
    %63 = arith.addf %51, %62 : vector<32x256xf32>
    %64 = vector.extract_strided_slice %4 {offsets = [0, 17], sizes = [8, 256], strides = [1, 1]} : vector<8x290xbf16> to vector<8x256xbf16>
    %c4 = arith.constant 4 : index
    %c0_24 = arith.constant 0 : index
    %c0_25 = arith.constant 0 : index
    %65 = vector.load %arg2[%c4, %c0_24, %c0_25] : memref<9x32x8xbf16, #tpu.memory_space<vmem>>, vector<1x32x8xbf16>
    %66 = vector.shape_cast %65 : vector<1x32x8xbf16> to vector<32x8xbf16>
    %cst_26 = arith.constant dense<0.000000e+00> : vector<32x256xf32>
    %67 = tpu.matmul %66, %64, %cst_26 {dimension_numbers = #tpu.dot_dimension_numbers<[1], [0], [0], [1], [0, 0, 1, 1], [], []>} : vector<32x8xbf16>, vector<8x256xbf16>, vector<32x256xf32> -> vector<32x256xf32>
    %68 = arith.addf %63, %67 : vector<32x256xf32>
    %69 = vector.extract_strided_slice %4 {offsets = [0, 18], sizes = [8, 256], strides = [1, 1]} : vector<8x290xbf16> to vector<8x256xbf16>
    %c15_i32_27 = arith.constant 15 : i32
    %70 = vector.broadcast %c15_i32_27 : i32 to vector<1x256xi32>
    %71 = arith.cmpi slt, %21, %70 : vector<1x256xi32>
    %c0_i32_28 = arith.constant 0 : i32
    %72 = arith.sitofp %c0_i32_28 : i32 to bf16
    %73 = vector.shape_cast %71 : vector<1x256xi1> to vector<1x256xi1>
    %74 = vector.broadcast %73 : vector<1x256xi1> to vector<8x256xi1>
    %75 = vector.broadcast %72 : bf16 to vector<8x256xbf16>
    %76 = arith.select %74, %69, %75 : vector<8x256xi1>, vector<8x256xbf16>
    %c5 = arith.constant 5 : index
    %c0_29 = arith.constant 0 : index
    %c0_30 = arith.constant 0 : index
    %77 = vector.load %arg2[%c5, %c0_29, %c0_30] : memref<9x32x8xbf16, #tpu.memory_space<vmem>>, vector<1x32x8xbf16>
    %78 = vector.shape_cast %77 : vector<1x32x8xbf16> to vector<32x8xbf16>
    %cst_31 = arith.constant dense<0.000000e+00> : vector<32x256xf32>
    %79 = tpu.matmul %78, %76, %cst_31 {dimension_numbers = #tpu.dot_dimension_numbers<[1], [0], [0], [1], [0, 0, 1, 1], [], []>} : vector<32x8xbf16>, vector<8x256xbf16>, vector<32x256xf32> -> vector<32x256xf32>
    %80 = arith.addf %68, %79 : vector<32x256xf32>
    %81 = vector.extract_strided_slice %4 {offsets = [0, 32], sizes = [8, 256], strides = [1, 1]} : vector<8x290xbf16> to vector<8x256xbf16>
    %c1_i32_32 = arith.constant 1 : i32
    %82 = vector.broadcast %c1_i32_32 : i32 to vector<1x256xi32>
    %83 = arith.cmpi sge, %21, %82 : vector<1x256xi32>
    %c0_i32_33 = arith.constant 0 : i32
    %84 = arith.sitofp %c0_i32_33 : i32 to bf16
    %85 = vector.shape_cast %83 : vector<1x256xi1> to vector<1x256xi1>
    %86 = vector.broadcast %85 : vector<1x256xi1> to vector<8x256xi1>
    %87 = vector.broadcast %84 : bf16 to vector<8x256xbf16>
    %88 = arith.select %86, %81, %87 : vector<8x256xi1>, vector<8x256xbf16>
    %c6 = arith.constant 6 : index
    %c0_34 = arith.constant 0 : index
    %c0_35 = arith.constant 0 : index
    %89 = vector.load %arg2[%c6, %c0_34, %c0_35] : memref<9x32x8xbf16, #tpu.memory_space<vmem>>, vector<1x32x8xbf16>
    %90 = vector.shape_cast %89 : vector<1x32x8xbf16> to vector<32x8xbf16>
    %cst_36 = arith.constant dense<0.000000e+00> : vector<32x256xf32>
    %91 = tpu.matmul %90, %88, %cst_36 {dimension_numbers = #tpu.dot_dimension_numbers<[1], [0], [0], [1], [0, 0, 1, 1], [], []>} : vector<32x8xbf16>, vector<8x256xbf16>, vector<32x256xf32> -> vector<32x256xf32>
    %92 = arith.addf %80, %91 : vector<32x256xf32>
    %93 = vector.extract_strided_slice %4 {offsets = [0, 33], sizes = [8, 256], strides = [1, 1]} : vector<8x290xbf16> to vector<8x256xbf16>
    %c7 = arith.constant 7 : index
    %c0_37 = arith.constant 0 : index
    %c0_38 = arith.constant 0 : index
    %94 = vector.load %arg2[%c7, %c0_37, %c0_38] : memref<9x32x8xbf16, #tpu.memory_space<vmem>>, vector<1x32x8xbf16>
    %95 = vector.shape_cast %94 : vector<1x32x8xbf16> to vector<32x8xbf16>
    %cst_39 = arith.constant dense<0.000000e+00> : vector<32x256xf32>
    %96 = tpu.matmul %95, %93, %cst_39 {dimension_numbers = #tpu.dot_dimension_numbers<[1], [0], [0], [1], [0, 0, 1, 1], [], []>} : vector<32x8xbf16>, vector<8x256xbf16>, vector<32x256xf32> -> vector<32x256xf32>
    %97 = arith.addf %92, %96 : vector<32x256xf32>
    %98 = vector.extract_strided_slice %4 {offsets = [0, 34], sizes = [8, 256], strides = [1, 1]} : vector<8x290xbf16> to vector<8x256xbf16>
    %c15_i32_40 = arith.constant 15 : i32
    %99 = vector.broadcast %c15_i32_40 : i32 to vector<1x256xi32>
    %100 = arith.cmpi slt, %21, %99 : vector<1x256xi32>
    %c0_i32_41 = arith.constant 0 : i32
    %101 = arith.sitofp %c0_i32_41 : i32 to bf16
    %102 = vector.shape_cast %100 : vector<1x256xi1> to vector<1x256xi1>
    %103 = vector.broadcast %102 : vector<1x256xi1> to vector<8x256xi1>
    %104 = vector.broadcast %101 : bf16 to vector<8x256xbf16>
    %105 = arith.select %103, %98, %104 : vector<8x256xi1>, vector<8x256xbf16>
    %c8 = arith.constant 8 : index
    %c0_42 = arith.constant 0 : index
    %c0_43 = arith.constant 0 : index
    %106 = vector.load %arg2[%c8, %c0_42, %c0_43] : memref<9x32x8xbf16, #tpu.memory_space<vmem>>, vector<1x32x8xbf16>
    %107 = vector.shape_cast %106 : vector<1x32x8xbf16> to vector<32x8xbf16>
    %cst_44 = arith.constant dense<0.000000e+00> : vector<32x256xf32>
    %108 = tpu.matmul %107, %105, %cst_44 {dimension_numbers = #tpu.dot_dimension_numbers<[1], [0], [0], [1], [0, 0, 1, 1], [], []>} : vector<32x8xbf16>, vector<8x256xbf16>, vector<32x256xf32> -> vector<32x256xf32>
    %109 = arith.addf %97, %108 : vector<32x256xf32>
    %c0_45 = arith.constant 0 : index
    %c0_46 = arith.constant 0 : index
    %110 = vector.load %arg3[%c0_45, %c0_46] : memref<32x1xf32, #tpu.memory_space<vmem>>, vector<32x1xf32>
    %111 = vector.broadcast %110 : vector<32x1xf32> to vector<32x256xf32>
    %112 = arith.addf %109, %111 : vector<32x256xf32>
    %c0_47 = arith.constant 0 : index
    %c0_48 = arith.constant 0 : index
    %c0_49 = arith.constant 0 : index
    %113 = vector.load %arg4[%c0_47, %c0_48, %c0_49] : memref<1x32x256xf32, #tpu.memory_space<vmem>>, vector<1x32x256xf32>
    %114 = vector.shape_cast %113 : vector<1x32x256xf32> to vector<32x256xf32>
    %115 = vector.shape_cast %112 : vector<32x256xf32> to vector<1x32x256xf32>
    tpu.vector_store %arg4[%c0_47, %c0_48, %c0_49], %115 {strides = array<i32>} : memref<1x32x256xf32, #tpu.memory_space<vmem>>, vector<1x32x256xf32>,
    return
  }
  func.func @transform_0(%arg0: i32) -> (i32, i32, i32) {
    %c0_i32 = arith.constant 0 : i32
    %c0_i32_0 = arith.constant 0 : i32
    %c0_i32_1 = arith.constant 0 : i32
    return %arg0, %c0_i32, %c0_i32_0 : i32, i32, i32
  }
  func.func @transform_1(%arg0: i32) -> (i32, i32, i32) {
    %c0_i32 = arith.constant 0 : i32
    %c0_i32_0 = arith.constant 0 : i32
    %c0_i32_1 = arith.constant 0 : i32
    %c0_i32_2 = arith.constant 0 : i32
    return %c0_i32, %c0_i32_0, %c0_i32_1 : i32, i32, i32
  }
  func.func @transform_2(%arg0: i32) -> (i32, i32) {
    %c0_i32 = arith.constant 0 : i32
    %c0_i32_0 = arith.constant 0 : i32
    %c0_i32_1 = arith.constant 0 : i32
    return %c0_i32, %c0_i32_0 : i32, i32
  }
  func.func @transform_3(%arg0: i32) -> (i32, i32, i32) {
    %c0_i32 = arith.constant 0 : i32
    %c0_i32_0 = arith.constant 0 : i32
    %c0_i32_1 = arith.constant 0 : i32
    return %arg0, %c0_i32, %c0_i32_0 : i32, i32, i32
  }
}

</mosaic_0001>

<llo_original>
// kernel: tile.8
$region0: #{tile.8}
  #allocation0 [shape = 's32[1]{0}', space=sflag, size = 0x4, scoped, tag = 'scoped memory for tile.8']
  %s0 = inlined_call_operand.vmem [shape: f32[8], index: 0, kind: input, shape index: {}]
  %s1 = inlined_call_operand.vmem [shape: f32[4,8], index: 1, kind: output, shape index: {}]
  // Predicated region
  $region2: #{tile.8} parent=0 // pred_check
    _
  $region3: #{tile.8} parent=0 // pred_check_branch
    %3 = sbr.rel (0) target = $region5
  $region4: #{tile.8} parent=0 // pred_region
    _
  $region5: #{tile.8} parent=0 // pred_fallthru
    _
  %v4 = vld [vmem:[%s0] ss:$0 sm:$0xff]
  %5 = vst [vmem:[%s1] sm:$0xf] %v4

// kernel: tile.0
$region0: #{tile.0}
  %s0 = inlined_call_operand.vmem [shape: f32[4,8], index: 0, kind: input, shape index: {}]
  %s1 = inlined_call_operand.vmem [shape: f32[32,1], index: 1, kind: output, shape index: {}]
  $region1: #{tile.0} parent=0
    #allocation0 [shape = 'u8[4096]{0}', space=vmem, size = 0x1000, scoped, tag = 'scoped mem for input reshape']
    %s3 = sshllo.u32 0, 4
    %v4 = vld [vmem:[%s0] sm:%s3]
    %5 = vst [vmem:[#allocation0] sm:%s3] %v4
    %v6 = vld [vmem:[#allocation0] sm:$0xf]
    %vm7 = vcmask 7168
    %8 = vst.msk [vmem:[%s1] ss:$8 sm:$0xf] %vm7, %v6
    %v9 = vld [vmem:[#allocation0] sm:$0xf]
    %10 = vrot.lane.b32.xlu0 %v9, 127
    %v11 = vpop.permute.xlu0 %10
    %vm12 = vcmask 7168
    %s13 = scalar_lea.vmem %s1, 1
    %14 = vst.msk [vmem:[%s13] ss:$8 sm:$0xf] %vm12, %v11
    %v15 = vld [vmem:[#allocation0] sm:$0xf]
    %16 = vrot.lane.b32.xlu0 %v15, 126
    %v17 = vpop.permute.xlu0 %16
    %vm18 = vcmask 7168
    %s19 = scalar_lea.vmem %s1, 2
    %20 = vst.msk [vmem:[%s19] ss:$8 sm:$0xf] %vm18, %v17
    %v21 = vld [vmem:[#allocation0] sm:$0xf]
    %22 = vrot.lane.b32.xlu0 %v21, 125
    %v23 = vpop.permute.xlu0 %22
    %vm24 = vcmask 7168
    %s25 = scalar_lea.vmem %s1, 3
    %26 = vst.msk [vmem:[%s25] ss:$8 sm:$0xf] %vm24, %v23
    %v27 = vld [vmem:[#allocation0] sm:$0xf]
    %28 = vrot.lane.b32.xlu0 %v27, 124
    %v29 = vpop.permute.xlu0 %28
    %vm30 = vcmask 7168
    %s31 = scalar_lea.vmem %s1, 4
    %32 = vst.msk [vmem:[%s31] ss:$8 sm:$0xf] %vm30, %v29
    %v33 = vld [vmem:[#allocation0] sm:$0xf]
    %34 = vrot.lane.b32.xlu0 %v33, 123
    %v35 = vpop.permute.xlu0 %34
    %vm36 = vcmask 7168
    %s37 = scalar_lea.vmem %s1, 5
    %38 = vst.msk [vmem:[%s37] ss:$8 sm:$0xf] %vm36, %v35
    %v39 = vld [vmem:[#allocation0] sm:$0xf]
    %40 = vrot.lane.b32.xlu0 %v39, 122
    %v41 = vpop.permute.xlu0 %40
    %vm42 = vcmask 7168
    %s43 = scalar_lea.vmem %s1, 6
    %44 = vst.msk [vmem:[%s43] ss:$8 sm:$0xf] %vm42, %v41
    %v45 = vld [vmem:[#allocation0] sm:$0xf]
    %46 = vrot.lane.b32.xlu0 %v45, 121
    %v47 = vpop.permute.xlu0 %46
    %vm48 = vcmask 7168
    %s49 = scalar_lea.vmem %s1, 7
    %50 = vst.msk [vmem:[%s49] ss:$8 sm:$0xf] %vm48, %v47

// kernel: upsample_forward.1
$region0: #{upsample_forward.1}
  #allocation0 [shape = 'u32[]', space=smem, size = 0x4, offset = 0x4, fixed_abs, tag = 'smem constant byte address 0x4 - core index']
  #allocation1 [shape = 'u32[144,128]{1,0:T(1,128)}', space=vmem, size = 0x12000, scoped, tag = 'internal scratch']
  %s0 = inlined_call_operand.vmem [shape: f32[2,8,256], index: 0, kind: input, shape index: {}]
  %s1 = inlined_call_operand.vmem [shape: bf16[9,32,8], index: 1, kind: input, shape index: {}]
  %s2 = inlined_call_operand.vmem [shape: f32[32,1], index: 2, kind: input, shape index: {}]
  %s3 = inlined_call_operand.vmem [shape: f32[2,32,256], index: 3, kind: output, shape index: {}]
  %s4 = sld [smem:[#allocation0]]
  $region45: #{upsample_forward.1} parent=0
    _
  %s6 = ssub.s32 1, %s4
  %s7 = scalar_select 0, %s6, %s4
  loop: start=0, step=1, limit=4
  $region2: #{upsample_forward.1} parent=0 // loop_pre_header
    _
  $region3: #{upsample_forward.1} parent=0 // loop_header
    %s9 = sphi 0, %s13
    %p10 = scmp.ge.s32.totalorder %s9, 4
    %s19 = sphi 0, %s21
    %s22 = sphi 0, %s19
    %s23 = sphi 0, %s22
    %s39 = sphi 0, %s23
    %s43 = sphi 0, %s43
    %s45 = sphi 0, %s43
    %s46 = sphi 0, %s45
    %s60 = sphi 0, %s46
    %s64 = sphi 0, %s64
    %s66 = sphi 0, %s64
    %s67 = sphi 0, %s66
    %s81 = sphi 0, %s67
    %s87 = sphi 0, %s89
    %s90 = sphi 0, %s87
    %s91 = sphi 0, %s90
    %s107 = sphi 0, %s91
  $region4: #{upsample_forward.1} parent=0 // loop_header_branch
    %12 = sbr.rel (%p10) target = $region8
  $region5: #{upsample_forward.1} parent=0 // loop_body
    %s14 = ssub.s32 %s9, 1
    %s15 = ssub.s32 %s9, 2
    %s16 = sadd.s32 %s9, 1
    %s17 = ssub.s32 %s9, %s16
    %p18 = scmp.eq.s32.totalorder %s17, 0
    %s20 = sadd.s32 %s19, 1
    %s21 = scalar_select %p18, %s19, %s20
    %p24 = pneg %p18
    %p25 = scmp.eq.s32.totalorder %s9, 1
    %p26 = por %p24, %p25
    %p27 = scmp.ne.s32.totalorder %s19, %s22
    %p28 = scmp.eq.s32.totalorder %s9, 0
    %p29 = por %p27, %p28
    %p30 = scmp.ne.s32.totalorder %s19, %s22
    %p31 = scmp.eq.s32.totalorder %s14, 1
    %p32 = por %p30, %p31
    %p33 = scmp.ne.s32.totalorder %s22, %s23
    %p34 = scmp.eq.s32.totalorder %s14, 0
    %p35 = por %p33, %p34
    %p36 = scmp.ne.s32.totalorder %s22, %s23
    %p37 = scmp.eq.s32.totalorder %s15, 1
    %p38 = por %p36, %p37
    %p40 = scmp.ne.s32.totalorder %s23, %s39
    %p41 = scmp.eq.s32.totalorder %s15, 0
    %p42 = por %p40, %p41
    %s44 = sadd.s32 %s43, 1
    %p47 = scmp.eq.s32.totalorder %s9, 1
    %p48 = scmp.ne.s32.totalorder %s43, %s45
    %p49 = scmp.eq.s32.totalorder %s9, 0
    %p50 = por %p48, %p49
    %p51 = scmp.ne.s32.totalorder %s43, %s45
    %p52 = scmp.eq.s32.totalorder %s14, 1
    %p53 = por %p51, %p52
    %p54 = scmp.ne.s32.totalorder %s45, %s46
    %p55 = scmp.eq.s32.totalorder %s14, 0
    %p56 = por %p54, %p55
    %p57 = scmp.ne.s32.totalorder %s45, %s46
    %p58 = scmp.eq.s32.totalorder %s15, 1
    %p59 = por %p57, %p58
    %p61 = scmp.ne.s32.totalorder %s46, %s60
    %p62 = scmp.eq.s32.totalorder %s15, 0
    %p63 = por %p61, %p62
    %s65 = sadd.s32 %s64, 1
    %p68 = scmp.eq.s32.totalorder %s9, 1
    %p69 = scmp.ne.s32.totalorder %s64, %s66
    %p70 = scmp.eq.s32.totalorder %s9, 0
    %p71 = por %p69, %p70
    %p72 = scmp.ne.s32.totalorder %s64, %s66
    %p73 = scmp.eq.s32.totalorder %s14, 1
    %p74 = por %p72, %p73
    %p75 = scmp.ne.s32.totalorder %s66, %s67
    %p76 = scmp.eq.s32.totalorder %s14, 0
    %p77 = por %p75, %p76
    %p78 = scmp.ne.s32.totalorder %s66, %s67
    %p79 = scmp.eq.s32.totalorder %s15, 1
    %p80 = por %p78, %p79
    %p82 = scmp.ne.s32.totalorder %s67, %s81
    %p83 = scmp.eq.s32.totalorder %s15, 0
    %p84 = por %p82, %p83
    %s85 = ssub.s32 %s9, %s16
    %p86 = scmp.eq.s32.totalorder %s85, 0
    %s88 = sadd.s32 %s87, 1
    %s89 = scalar_select %p86, %s87, %s88
    %p92 = pneg %p86
    %p93 = scmp.eq.s32.totalorder %s9, 1
    %p94 = por %p92, %p93
    %p95 = scmp.ne.s32.totalorder %s87, %s90
    %p96 = scmp.eq.s32.totalorder %s9, 0
    %p97 = por %p95, %p96
    %p98 = scmp.ne.s32.totalorder %s87, %s90
    %p99 = scmp.eq.s32.totalorder %s14, 1
    %p100 = por %p98, %p99
    %p101 = scmp.ne.s32.totalorder %s90, %s91
    %p102 = scmp.eq.s32.totalorder %s14, 0
    %p103 = por %p101, %p102
    %p104 = scmp.ne.s32.totalorder %s90, %s91
    %p105 = scmp.eq.s32.totalorder %s15, 1
    %p106 = por %p104, %p105
    %p108 = scmp.ne.s32.totalorder %s91, %s107
    %p109 = scmp.eq.s32.totalorder %s15, 0
    %p110 = por %p108, %p109
    %p111 = scmp.le.s32.totalorder 1, %s9
    %p112 = scmp.lt.s32.totalorder %s9, 3
    %p113 = pnand %p111, %p112
    %p114 = pneg %p113
    // Predicated region
    $region9: #{upsample_forward.1} parent=5 // pred_check
      _
    $region10: #{upsample_forward.1} parent=5 // pred_check_branch
      %116 = sbr.rel (%p113) target = $region12
    $region11: #{upsample_forward.1} parent=5 // pred_region
      %s117 = ssub.s32 %s9, 1
      // Predicated region
      $region13: #{upsample_forward.1} parent=11 // pred_check
        %p118 = pneg %p56
      $region14: #{upsample_forward.1} parent=11 // pred_check_branch
        %120 = sbr.rel (%p118) target = $region16
      $region15: #{upsample_forward.1} parent=11 // pred_region
        _
      $region16: #{upsample_forward.1} parent=11 // pred_fallthru
        _
      // Predicated region
      $region17: #{upsample_forward.1} parent=11 // pred_check
        %p121 = pneg %p77
      $region18: #{upsample_forward.1} parent=11 // pred_check_branch
        %123 = sbr.rel (%p121) target = $region20
      $region19: #{upsample_forward.1} parent=11 // pred_region
        _
      $region20: #{upsample_forward.1} parent=11 // pred_fallthru
        _
    $region12: #{upsample_forward.1} parent=5 // pred_fallthru
      _
    %p124 = scmp.lt.s32.totalorder %s9, 2
    // Predicated region
    $region21: #{upsample_forward.1} parent=5 // pred_check
      %p125 = pneg %p124
    $region22: #{upsample_forward.1} parent=5 // pred_check_branch
      %127 = sbr.rel (%p125) target = $region24
    $region23: #{upsample_forward.1} parent=5 // pred_region
      // Predicated region
      $region25: #{upsample_forward.1} parent=23 // pred_check
        %p128 = pneg %p29
      $region26: #{upsample_forward.1} parent=23 // pred_check_branch
        %130 = sbr.rel (%p128) target = $region28
      $region27: #{upsample_forward.1} parent=23 // pred_region
        %p131 = scmp.lt.s32.totalorder %s9, 1
        %s132 = scalar_select %p131, %s9, 1
        %s133 = smul.addr %s132, 2
        %s134 = smul.addr %s133, 8
        %s135 = scalar_lea.vmem %s0, %s134
      $region28: #{upsample_forward.1} parent=23 // pred_fallthru
        _
    $region24: #{upsample_forward.1} parent=5 // pred_fallthru
      _
    %p136 = scmp.le.s32.totalorder 1, %s9
    %p137 = scmp.lt.s32.totalorder %s9, 3
    %p138 = pnand %p136, %p137
    %p139 = pneg %p138
    // Predicated region
    $region29: #{upsample_forward.1} parent=5 // pred_check
      _
    $region30: #{upsample_forward.1} parent=5 // pred_check_branch
      %141 = sbr.rel (%p138) target = $region32
    $region31: #{upsample_forward.1} parent=5 // pred_region
      %s142 = ssub.s32 %s9, 1
      %p143 = scmp.lt.s32.totalorder %s14, 1
      %s144 = scalar_select %p143, %s14, 1
      %s145 = smul.addr %s144, 2
      %s146 = smul.addr %s145, 8
      %s147 = scalar_lea.vmem %s0, %s146
      %p148 = pneg %p35
      %p149 = pneg %p32
      %p150 = pneg %p56
      %p151 = pneg %p53
      %p152 = pneg %p77
      %p153 = pneg %p74
      %p154 = pneg %p103
      %p155 = pneg %p100
      %p156 = scmp.lt.s32.totalorder %s14, 1
      %s157 = scalar_select %p156, %s14, 1
      %s158 = smul.addr %s157, 8
      %s159 = smul.addr %s158, 8
      %s160 = scalar_lea.vmem %s3, %s159
      %p161 = scmp.lt.s32.totalorder %s14, 1
      %s162 = scalar_select %p161, %s14, 1
      %s163 = smul.addr %s162, 2
      %s164 = smul.addr %s163, 8
      %s165 = scalar_lea.vmem %s0, %s164
      %p166 = scmp.lt.s32.totalorder %s14, 1
      %s167 = scalar_select %p166, %s14, 1
      %s168 = smul.addr %s167, 8
      %s169 = smul.addr %s168, 8
      %s170 = scalar_lea.vmem %s3, %s169
      %v174 = vld [vmem:[%s165] sm:$0xff]
      %v175 = vld [vmem:[%s165 + $0x8] sm:$0xff]
      %v176 = vpack.c.bf16 %v174, %v174
      %v177 = vpack.c.bf16 %v175, %v175
      %180 = vrot.lane.b32.xlu0 %v176, 17
      %v181 = vpop.permute.xlu0 %180
      %182 = vrot.lane.b32.xlu0 %v177, 17
      %v183 = vpop.permute.xlu0 %182
      %vm184 = vcmask 138240
      %v185 = vsel %vm184, %v181, %v183
      %vm187 = vcmask 138240
      %v190 = vsel %vm187, 0, %v181
      %v193 = vsel %vm187, %v183, 0
      %v195 = vlaneseq
      %v196 = vand.u32 %v195, 127
      %v197 = vadd.s32 %v196, 128
      %vm198 = vcmp.lt.s32.totalorder %v196, 0
      %v199 = vsub.s32 0, %v196
      %v200 = vsel %vm198, %v199, %v196
      %v201 = vshrl.u32 %v200, 4
      %v202 = vand.u32 %v200, 15
      %v203 = vsub.s32 0, %v202
      %v204 = vsel %vm198, %v203, %v202
      %vm205 = vcmp.lt.s32.totalorder %v197, 0
      %v206 = vsub.s32 0, %v197
      %v207 = vsel %vm205, %v206, %v197
      %v208 = vshrl.u32 %v207, 4
      %v209 = vand.u32 %v207, 15
      %v210 = vsub.s32 0, %v209
      %v211 = vsel %vm205, %v210, %v209
      %vm212 = vcmp.ne.s32.totalorder %v204, 0
      %vm213 = vcmp.ne.s32.totalorder %v211, 0
      %vm214 = vcmp.lt.s32.totalorder %v204, 0
      %vm215 = vcmp.lt.s32.totalorder %v211, 0
      %vm216 = vmand %vm214, %vm212
      %vm217 = vmand %vm215, %vm213
      %v218 = vadd.s32 %v204, 16
      %v219 = vadd.s32 %v211, 16
      %v220 = vsel %vm216, %v218, %v204
      %v221 = vsel %vm217, %v219, %v211
      %vm222 = vcmp.ge.s32.totalorder %v220, 1
      %vm223 = vcmp.ge.s32.totalorder %v221, 1
      %v224 = vsel %vm222, 1, 0
      %v225 = vsel %vm223, 1, 0
      %vm226 = vcmp.eq.s32.totalorder %v224, 1
      %vm227 = vcmp.eq.s32.totalorder %v225, 1
      %vm228 = vmpackc.low %vm227, %vm226
      %v229 = vsel %vm228, 65537, 0
      %v230 = vlaneseq
      %v231 = vshrl.u32 %v230, 7
      %v232 = vsub.s32 0, %v231
      %v233 = vrot.slane %v229, %v232
      %v234 = vlaneseq
      %v235 = vshrl.u32 %v234, 7
      %v236 = vsub.s32 4, %v235
      %v237 = vrot.slane %v229, %v236
      %vm238 = vcmp.ne.s16.totalorder %v233, 0
      %vm239 = vcmp.ne.s16.totalorder %v237, 0
      %v240 = vsel %vm238, %v190, 0
      %v241 = vsel %vm239, %v185, 0
      %v242 = vld [vmem:[%s1] sm:$0xf]
      %v243 = vld [vmem:[%s1 + $0x4] sm:$0xf]
      %v244 = vld [vmem:[%s1 + $0x8] sm:$0xf]
      %v245 = vld [vmem:[%s1 + $0xc] sm:$0xf]
      %s246 = scalar_lea.vmem %s1, 16
      %v247 = vld [vmem:[%s246] sm:$0xf]
      %v248 = vld [vmem:[%s246 + $0x4] sm:$0xf]
      %v249 = vld [vmem:[%s246 + $0x8] sm:$0xf]
      %v250 = vld [vmem:[%s246 + $0xc] sm:$0xf]
      %v255 = vunpack.c.l.b16 %v247
      %v256 = vunpack.c.l.b16 %v248
      %v257 = vunpack.c.l.b16 %v249
      %v258 = vunpack.c.l.b16 %v250
      %v259 = vpack.c.b16 %v256, %v255
      %v260 = vpack.c.b16 %v258, %v257
      %263 = vrot.lane.b32.xlu0 %v190, 127
      %v264 = vpop.permute.xlu0 %263
      %265 = vrot.lane.b32.xlu0 %v185, 127
      %v266 = vpop.permute.xlu0 %265
      %267 = vrot.lane.b32.xlu0 %v193, 127
      %v268 = vpop.permute.xlu0 %267
      %vm269 = vcmask 1039360
      %v270 = vsel %vm269, %v264, %v266
      %v271 = vsel %vm269, %v266, %v268
      %vm272 = vcmask 64512
      %v274 = vsel %vm272, %v259, 0
      %v277 = vsel %vm272, %v260, 0
      %vm279 = vcmask 1043456
      %v281 = vsel %vm279, %v270, 0
      %v284 = vsel %vm279, %v271, 0
      %286 = vmatprep.subr.bf16.mxu0 %v284
      %287 = vmatpush1.bf16.msra.mxu0 %v281
      %288 = vmatprep.subr.bf16.mxu0 0
      %289 = vmatpush1.bf16.msra.mxu0 0
      %290 = vmatprep.subr.bf16.mxu0 0
      %291 = vmatpush1.bf16.msra.mxu0 0
      %292 = vmatprep.subr.bf16.mxu0 0
      %293 = vmatpush1.bf16.msra.mxu0 0
      %294 = vmatprep.subr.bf16.mxu0 0
      %295 = vmatpush1.bf16.msra.mxu0 0
      %296 = vmatprep.subr.bf16.mxu0 0
      %297 = vmatpush1.bf16.msra.mxu0 0
      %298 = vmatprep.subr.bf16.mxu0 0
      %299 = vmatpush1.bf16.msra.mxu0 0
      %300 = vmatprep.subr.bf16.mxu0 0
      %301 = vmatpush1.bf16.msra.mxu0 0
      %302 = vmatprep.subr.bf16.mxu0 0
      %303 = vmatpush1.bf16.msra.mxu0 0
      %304 = vmatprep.subr.bf16.mxu0 0
      %305 = vmatpush1.bf16.msra.mxu0 0
      %306 = vmatprep.subr.bf16.mxu0 0
      %307 = vmatpush1.bf16.msra.mxu0 0
      %308 = vmatprep.subr.bf16.mxu0 0
      %309 = vmatpush1.bf16.msra.mxu0 0
      %310 = vmatprep.subr.bf16.mxu0 0
      %311 = vmatpush1.bf16.msra.mxu0 0
      %312 = vmatprep.subr.bf16.mxu0 0
      %313 = vmatpush1.bf16.msra.mxu0 0
      %314 = vmatprep.subr.bf16.mxu0 0
      %315 = vmatpush1.bf16.msra.mxu0 0
      %316 = vmatprep.subr.bf16.mxu0 0
      %317 = vmatpush1.bf16.msra.mxu0 0
      %318 = vmatprep.mubr.bf16.mxu0 0
      %319 = vmatmul.mubr.bf16.gmra.mrb[0].mxu0 %v274
      %v320 = vpop.f32.mrb[0].mxu0
      %v321 = vadd.f32 0.0, %v320
      %v322 = vpop.f32.mrb[0].mxu0
      %v323 = vadd.f32 0.0, %v322
      %v324 = vpop.f32.mrb[0].mxu0
      %v325 = vadd.f32 0.0, %v324
      %v326 = vpop.f32.mrb[0].mxu0
      %v327 = vadd.f32 0.0, %v326
      %328 = vmatprep.mubr.bf16.mxu0 0
      %329 = vmatmul.mubr.bf16.gmra.mrb[0].mxu0 %v277
      %v330 = vpop.f32.mrb[0].mxu0
      %v331 = vadd.f32 0.0, %v330
      %v332 = vpop.f32.mrb[0].mxu0
      %v333 = vadd.f32 0.0, %v332
      %v334 = vpop.f32.mrb[0].mxu0
      %v335 = vadd.f32 0.0, %v334
      %v336 = vpop.f32.mrb[0].mxu0
      %v337 = vadd.f32 0.0, %v336
      %338 = vdwg.mxu0
      %v343 = vunpack.c.l.b16 %v242
      %v344 = vunpack.c.l.b16 %v243
      %v345 = vunpack.c.l.b16 %v244
      %v346 = vunpack.c.l.b16 %v245
      %v347 = vpack.c.b16 %v344, %v343
      %v348 = vpack.c.b16 %v346, %v345
      %v350 = vsel %vm272, %v347, 0
      %v353 = vsel %vm272, %v348, 0
      %v356 = vsel %vm279, %v240, 0
      %v359 = vsel %vm279, %v241, 0
      %361 = vmatprep.subr.bf16.mxu0 %v359
      %362 = vmatpush1.bf16.msra.mxu0 %v356
      %363 = vmatprep.subr.bf16.mxu0 0
      %364 = vmatpush1.bf16.msra.mxu0 0
      %365 = vmatprep.subr.bf16.mxu0 0
      %366 = vmatpush1.bf16.msra.mxu0 0
      %367 = vmatprep.subr.bf16.mxu0 0
      %368 = vmatpush1.bf16.msra.mxu0 0
      %369 = vmatprep.subr.bf16.mxu0 0
      %370 = vmatpush1.bf16.msra.mxu0 0
      %371 = vmatprep.subr.bf16.mxu0 0
      %372 = vmatpush1.bf16.msra.mxu0 0
      %373 = vmatprep.subr.bf16.mxu0 0
      %374 = vmatpush1.bf16.msra.mxu0 0
      %375 = vmatprep.subr.bf16.mxu0 0
      %376 = vmatpush1.bf16.msra.mxu0 0
      %377 = vmatprep.subr.bf16.mxu0 0
      %378 = vmatpush1.bf16.msra.mxu0 0
      %379 = vmatprep.subr.bf16.mxu0 0
      %380 = vmatpush1.bf16.msra.mxu0 0
      %381 = vmatprep.subr.bf16.mxu0 0
      %382 = vmatpush1.bf16.msra.mxu0 0
      %383 = vmatprep.subr.bf16.mxu0 0
      %384 = vmatpush1.bf16.msra.mxu0 0
      %385 = vmatprep.subr.bf16.mxu0 0
      %386 = vmatpush1.bf16.msra.mxu0 0
      %387 = vmatprep.subr.bf16.mxu0 0
      %388 = vmatpush1.bf16.msra.mxu0 0
      %389 = vmatprep.subr.bf16.mxu0 0
      %390 = vmatpush1.bf16.msra.mxu0 0
      %391 = vmatprep.subr.bf16.mxu0 0
      %392 = vmatpush1.bf16.msra.mxu0 0
      %393 = vmatprep.mubr.bf16.mxu0 0
      %394 = vmatmul.mubr.bf16.gmra.mrb[0].mxu0 %v350
      %v395 = vpop.f32.mrb[0].mxu0
      %v396 = vadd.f32 %v321, %v395
      %v397 = vpop.f32.mrb[0].mxu0
      %v398 = vadd.f32 %v323, %v397
      %v399 = vpop.f32.mrb[0].mxu0
      %v400 = vadd.f32 %v325, %v399
      %v401 = vpop.f32.mrb[0].mxu0
      %v402 = vadd.f32 %v327, %v401
      %403 = vmatprep.mubr.bf16.mxu0 0
      %404 = vmatmul.mubr.bf16.gmra.mrb[0].mxu0 %v353
      %v405 = vpop.f32.mrb[0].mxu0
      %v406 = vadd.f32 %v331, %v405
      %v407 = vpop.f32.mrb[0].mxu0
      %v408 = vadd.f32 %v333, %v407
      %v409 = vpop.f32.mrb[0].mxu0
      %v410 = vadd.f32 %v335, %v409
      %v411 = vpop.f32.mrb[0].mxu0
      %v412 = vadd.f32 %v337, %v411
      %413 = vdwg.mxu0
      %vm414 = vcmp.lt.s32.totalorder %v220, 15
      %vm415 = vcmp.lt.s32.totalorder %v221, 15
      %v416 = vsel %vm414, 1, 0
      %v417 = vsel %vm415, 1, 0
      %vm418 = vcmp.eq.s32.totalorder %v416, 1
      %vm419 = vcmp.eq.s32.totalorder %v417, 1
      %vm420 = vmpackc.low %vm419, %vm418
      %v421 = vsel %vm420, 65537, 0
      %v422 = vlaneseq
      %v423 = vshrl.u32 %v422, 7
      %v424 = vsub.s32 0, %v423
      %v425 = vrot.slane %v421, %v424
      %v426 = vlaneseq
      %v427 = vshrl.u32 %v426, 7
      %v428 = vsub.s32 4, %v427
      %v429 = vrot.slane %v421, %v428
      %430 = vrot.lane.b32.xlu0 %v425, 2
      %v431 = vpop.permute.xlu0 %430
      %432 = vrot.lane.b32.xlu0 %v429, 2
      %v433 = vpop.permute.xlu0 %432
      %vm434 = vcmask 15360
      %v435 = vsel %vm434, %v431, %v433
      %vm436 = vcmp.ne.s16.totalorder %v431, 0
      %vm437 = vcmp.ne.s16.totalorder %v435, 0
      %vm438 = vcmp.ne.s16.totalorder %v433, 0
      %v439 = vsel %vm436, %v190, 0
      %v440 = vsel %vm437, %v185, 0
      %v441 = vsel %vm438, %v193, 0
      %s442 = scalar_lea.vmem %s1, 32
      %v443 = vld [vmem:[%s442] sm:$0xf]
      %v444 = vld [vmem:[%s442 + $0x4] sm:$0xf]
      %v445 = vld [vmem:[%s442 + $0x8] sm:$0xf]
      %v446 = vld [vmem:[%s442 + $0xc] sm:$0xf]
      %v451 = vunpack.c.l.b16 %v443
      %v452 = vunpack.c.l.b16 %v444
      %v453 = vunpack.c.l.b16 %v445
      %v454 = vunpack.c.l.b16 %v446
      %v455 = vpack.c.b16 %v452, %v451
      %v456 = vpack.c.b16 %v454, %v453
      %460 = vrot.lane.b32.xlu0 %v439, 126
      %v461 = vpop.permute.xlu0 %460
      %462 = vrot.lane.b32.xlu0 %v440, 126
      %v463 = vpop.permute.xlu0 %462
      %464 = vrot.lane.b32.xlu0 %v441, 126
      %v465 = vpop.permute.xlu0 %464
      %vm466 = vcmask 1031168
      %v467 = vsel %vm466, %v461, %v463
      %v468 = vsel %vm466, %v463, %v465
      %v470 = vsel %vm272, %v455, 0
      %v473 = vsel %vm272, %v456, 0
      %v476 = vsel %vm279, %v467, 0
      %v479 = vsel %vm279, %v468, 0
      %481 = vmatprep.subr.bf16.mxu0 %v479
      %482 = vmatpush1.bf16.msra.mxu0 %v476
      %483 = vmatprep.subr.bf16.mxu0 0
      %484 = vmatpush1.bf16.msra.mxu0 0
      %485 = vmatprep.subr.bf16.mxu0 0
      %486 = vmatpush1.bf16.msra.mxu0 0
      %487 = vmatprep.subr.bf16.mxu0 0
      %488 = vmatpush1.bf16.msra.mxu0 0
      %489 = vmatprep.subr.bf16.mxu0 0
      %490 = vmatpush1.bf16.msra.mxu0 0
      %491 = vmatprep.subr.bf16.mxu0 0
      %492 = vmatpush1.bf16.msra.mxu0 0
      %493 = vmatprep.subr.bf16.mxu0 0
      %494 = vmatpush1.bf16.msra.mxu0 0
      %495 = vmatprep.subr.bf16.mxu0 0
      %496 = vmatpush1.bf16.msra.mxu0 0
      %497 = vmatprep.subr.bf16.mxu0 0
      %498 = vmatpush1.bf16.msra.mxu0 0
      %499 = vmatprep.subr.bf16.mxu0 0
      %500 = vmatpush1.bf16.msra.mxu0 0
      %501 = vmatprep.subr.bf16.mxu0 0
      %502 = vmatpush1.bf16.msra.mxu0 0
      %503 = vmatprep.subr.bf16.mxu0 0
      %504 = vmatpush1.bf16.msra.mxu0 0
      %505 = vmatprep.subr.bf16.mxu0 0
      %506 = vmatpush1.bf16.msra.mxu0 0
      %507 = vmatprep.subr.bf16.mxu0 0
      %508 = vmatpush1.bf16.msra.mxu0 0
      %509 = vmatprep.subr.bf16.mxu0 0
      %510 = vmatpush1.bf16.msra.mxu0 0
      %511 = vmatprep.subr.bf16.mxu0 0
      %512 = vmatpush1.bf16.msra.mxu0 0
      %513 = vmatprep.mubr.bf16.mxu0 0
      %514 = vmatmul.mubr.bf16.gmra.mrb[0].mxu0 %v470
      %v515 = vpop.f32.mrb[0].mxu0
      %v516 = vadd.f32 0.0, %v515
      %v517 = vpop.f32.mrb[0].mxu0
      %v518 = vadd.f32 0.0, %v517
      %v519 = vpop.f32.mrb[0].mxu0
      %v520 = vadd.f32 0.0, %v519
      %v521 = vpop.f32.mrb[0].mxu0
      %v522 = vadd.f32 0.0, %v521
      %523 = vmatprep.mubr.bf16.mxu0 0
      %524 = vmatmul.mubr.bf16.gmra.mrb[0].mxu0 %v473
      %v525 = vpop.f32.mrb[0].mxu0
      %v526 = vadd.f32 0.0, %v525
      %v527 = vpop.f32.mrb[0].mxu0
      %v528 = vadd.f32 0.0, %v527
      %v529 = vpop.f32.mrb[0].mxu0
      %v530 = vadd.f32 0.0, %v529
      %v531 = vpop.f32.mrb[0].mxu0
      %v532 = vadd.f32 0.0, %v531
      %533 = vdwg.mxu0
      %v534 = vadd.f32 %v396, %v516
      %v535 = vadd.f32 %v398, %v518
      %v536 = vadd.f32 %v400, %v520
      %v537 = vadd.f32 %v402, %v522
      %v538 = vadd.f32 %v406, %v526
      %v539 = vadd.f32 %v408, %v528
      %v540 = vadd.f32 %v410, %v530
      %v541 = vadd.f32 %v412, %v532
      %542 = vrot.lane.b32.xlu0 %v233, 16
      %v543 = vpop.permute.xlu0 %542
      %544 = vrot.lane.b32.xlu0 %v237, 16
      %v545 = vpop.permute.xlu0 %544
      %vm546 = vcmask 130048
      %v547 = vsel %vm546, %v543, %v545
      %vm548 = vcmp.ne.s16.totalorder %v543, 0
      %vm549 = vcmp.ne.s16.totalorder %v547, 0
      %vm550 = vcmp.ne.s16.totalorder %v545, 0
      %v551 = vsel %vm548, %v190, 0
      %v552 = vsel %vm549, %v185, 0
      %v553 = vsel %vm550, %v193, 0
      %s554 = scalar_lea.vmem %s1, 48
      %v555 = vld [vmem:[%s554] sm:$0xf]
      %v556 = vld [vmem:[%s554 + $0x4] sm:$0xf]
      %v557 = vld [vmem:[%s554 + $0x8] sm:$0xf]
      %v558 = vld [vmem:[%s554 + $0xc] sm:$0xf]
      %v563 = vunpack.c.l.b16 %v555
      %v564 = vunpack.c.l.b16 %v556
      %v565 = vunpack.c.l.b16 %v557
      %v566 = vunpack.c.l.b16 %v558
      %v567 = vpack.c.b16 %v564, %v563
      %v568 = vpack.c.b16 %v566, %v565
      %572 = vrot.lane.b32.xlu0 %v551, 112
      %v573 = vpop.permute.xlu0 %572
      %574 = vrot.lane.b32.xlu0 %v552, 112
      %v575 = vpop.permute.xlu0 %574
      %576 = vrot.lane.b32.xlu0 %v553, 112
      %v577 = vpop.permute.xlu0 %576
      %vm578 = vcmask 916480
      %v579 = vsel %vm578, %v573, %v575
      %v580 = vsel %vm578, %v575, %v577
      %v582 = vsel %vm272, %v567, 0
      %v585 = vsel %vm272, %v568, 0
      %v588 = vsel %vm279, %v579, 0
      %v591 = vsel %vm279, %v580, 0
      %593 = vmatprep.subr.bf16.mxu0 %v591
      %594 = vmatpush1.bf16.msra.mxu0 %v588
      %595 = vmatprep.subr.bf16.mxu0 0
      %596 = vmatpush1.bf16.msra.mxu0 0
      %597 = vmatprep.subr.bf16.mxu0 0
      %598 = vmatpush1.bf16.msra.mxu0 0
      %599 = vmatprep.subr.bf16.mxu0 0
      %600 = vmatpush1.bf16.msra.mxu0 0
      %601 = vmatprep.subr.bf16.mxu0 0
      %602 = vmatpush1.bf16.msra.mxu0 0
      %603 = vmatprep.subr.bf16.mxu0 0
      %604 = vmatpush1.bf16.msra.mxu0 0
      %605 = vmatprep.subr.bf16.mxu0 0
      %606 = vmatpush1.bf16.msra.mxu0 0
      %607 = vmatprep.subr.bf16.mxu0 0
      %608 = vmatpush1.bf16.msra.mxu0 0
      %609 = vmatprep.subr.bf16.mxu0 0
      %610 = vmatpush1.bf16.msra.mxu0 0
      %611 = vmatprep.subr.bf16.mxu0 0
      %612 = vmatpush1.bf16.msra.mxu0 0
      %613 = vmatprep.subr.bf16.mxu0 0
      %614 = vmatpush1.bf16.msra.mxu0 0
      %615 = vmatprep.subr.bf16.mxu0 0
      %616 = vmatpush1.bf16.msra.mxu0 0
      %617 = vmatprep.subr.bf16.mxu0 0
      %618 = vmatpush1.bf16.msra.mxu0 0
      %619 = vmatprep.subr.bf16.mxu0 0
      %620 = vmatpush1.bf16.msra.mxu0 0
      %621 = vmatprep.subr.bf16.mxu0 0
      %622 = vmatpush1.bf16.msra.mxu0 0
      %623 = vmatprep.subr.bf16.mxu0 0
      %624 = vmatpush1.bf16.msra.mxu0 0
      %625 = vmatprep.mubr.bf16.mxu0 0
      %626 = vmatmul.mubr.bf16.gmra.mrb[0].mxu0 %v582
      %v627 = vpop.f32.mrb[0].mxu0
      %v628 = vadd.f32 0.0, %v627
      %v629 = vpop.f32.mrb[0].mxu0
      %v630 = vadd.f32 0.0, %v629
      %v631 = vpop.f32.mrb[0].mxu0
      %v632 = vadd.f32 0.0, %v631
      %v633 = vpop.f32.mrb[0].mxu0
      %v634 = vadd.f32 0.0, %v633
      %635 = vmatprep.mubr.bf16.mxu0 0
      %636 = vmatmul.mubr.bf16.gmra.mrb[0].mxu0 %v585
      %v637 = vpop.f32.mrb[0].mxu0
      %v638 = vadd.f32 0.0, %v637
      %v639 = vpop.f32.mrb[0].mxu0
      %v640 = vadd.f32 0.0, %v639
      %v641 = vpop.f32.mrb[0].mxu0
      %v642 = vadd.f32 0.0, %v641
      %v643 = vpop.f32.mrb[0].mxu0
      %v644 = vadd.f32 0.0, %v643
      %645 = vdwg.mxu0
      %v646 = vadd.f32 %v534, %v628
      %v647 = vadd.f32 %v535, %v630
      %v648 = vadd.f32 %v536, %v632
      %v649 = vadd.f32 %v537, %v634
      %v650 = vadd.f32 %v538, %v638
      %v651 = vadd.f32 %v539, %v640
      %v652 = vadd.f32 %v540, %v642
      %v653 = vadd.f32 %v541, %v644
      %s654 = scalar_lea.vmem %s1, 64
      %v655 = vld [vmem:[%s654] sm:$0xf]
      %v656 = vld [vmem:[%s654 + $0x4] sm:$0xf]
      %v657 = vld [vmem:[%s654 + $0x8] sm:$0xf]
      %v658 = vld [vmem:[%s654 + $0xc] sm:$0xf]
      %v663 = vunpack.c.l.b16 %v655
      %v664 = vunpack.c.l.b16 %v656
      %v665 = vunpack.c.l.b16 %v657
      %v666 = vunpack.c.l.b16 %v658
      %v667 = vpack.c.b16 %v664, %v663
      %v668 = vpack.c.b16 %v666, %v665
      %669 = vrot.lane.b32.xlu0 %v190, 111
      %v670 = vpop.permute.xlu0 %669
      %671 = vrot.lane.b32.xlu0 %v185, 111
      %v672 = vpop.permute.xlu0 %671
      %673 = vrot.lane.b32.xlu0 %v193, 111
      %v674 = vpop.permute.xlu0 %673
      %vm675 = vcmask 908288
      %v676 = vsel %vm675, %v670, %v672
      %v677 = vsel %vm675, %v672, %v674
      %v679 = vsel %vm272, %v667, 0
      %v682 = vsel %vm272, %v668, 0
      %v685 = vsel %vm279, %v676, 0
      %v688 = vsel %vm279, %v677, 0
      %690 = vmatprep.subr.bf16.mxu0 %v688
      %691 = vmatpush1.bf16.msra.mxu0 %v685
      %692 = vmatprep.subr.bf16.mxu0 0
      %693 = vmatpush1.bf16.msra.mxu0 0
      %694 = vmatprep.subr.bf16.mxu0 0
      %695 = vmatpush1.bf16.msra.mxu0 0
      %696 = vmatprep.subr.bf16.mxu0 0
      %697 = vmatpush1.bf16.msra.mxu0 0
      %698 = vmatprep.subr.bf16.mxu0 0
      %699 = vmatpush1.bf16.msra.mxu0 0
      %700 = vmatprep.subr.bf16.mxu0 0
      %701 = vmatpush1.bf16.msra.mxu0 0
      %702 = vmatprep.subr.bf16.mxu0 0
      %703 = vmatpush1.bf16.msra.mxu0 0
      %704 = vmatprep.subr.bf16.mxu0 0
      %705 = vmatpush1.bf16.msra.mxu0 0
      %706 = vmatprep.subr.bf16.mxu0 0
      %707 = vmatpush1.bf16.msra.mxu0 0
      %708 = vmatprep.subr.bf16.mxu0 0
      %709 = vmatpush1.bf16.msra.mxu0 0
      %710 = vmatprep.subr.bf16.mxu0 0
      %711 = vmatpush1.bf16.msra.mxu0 0
      %712 = vmatprep.subr.bf16.mxu0 0
      %713 = vmatpush1.bf16.msra.mxu0 0
      %714 = vmatprep.subr.bf16.mxu0 0
      %715 = vmatpush1.bf16.msra.mxu0 0
      %716 = vmatprep.subr.bf16.mxu0 0
      %717 = vmatpush1.bf16.msra.mxu0 0
      %718 = vmatprep.subr.bf16.mxu0 0
      %719 = vmatpush1.bf16.msra.mxu0 0
      %720 = vmatprep.subr.bf16.mxu0 0
      %721 = vmatpush1.bf16.msra.mxu0 0
      %722 = vmatprep.mubr.bf16.mxu0 0
      %723 = vmatmul.mubr.bf16.gmra.mrb[0].mxu0 %v679
      %v724 = vpop.f32.mrb[0].mxu0
      %v725 = vadd.f32 0.0, %v724
      %v726 = vpop.f32.mrb[0].mxu0
      %v727 = vadd.f32 0.0, %v726
      %v728 = vpop.f32.mrb[0].mxu0
      %v729 = vadd.f32 0.0, %v728
      %v730 = vpop.f32.mrb[0].mxu0
      %v731 = vadd.f32 0.0, %v730
      %732 = vmatprep.mubr.bf16.mxu0 0
      %733 = vmatmul.mubr.bf16.gmra.mrb[0].mxu0 %v682
      %v734 = vpop.f32.mrb[0].mxu0
      %v735 = vadd.f32 0.0, %v734
      %v736 = vpop.f32.mrb[0].mxu0
      %v737 = vadd.f32 0.0, %v736
      %v738 = vpop.f32.mrb[0].mxu0
      %v739 = vadd.f32 0.0, %v738
      %v740 = vpop.f32.mrb[0].mxu0
      %v741 = vadd.f32 0.0, %v740
      %742 = vdwg.mxu0
      %v743 = vadd.f32 %v646, %v725
      %v744 = vadd.f32 %v647, %v727
      %v745 = vadd.f32 %v648, %v729
      %v746 = vadd.f32 %v649, %v731
      %v747 = vadd.f32 %v650, %v735
      %v748 = vadd.f32 %v651, %v737
      %v749 = vadd.f32 %v652, %v739
      %v750 = vadd.f32 %v653, %v741
      %751 = vrot.lane.b32.xlu0 %v425, 18
      %v752 = vpop.permute.xlu0 %751
      %753 = vrot.lane.b32.xlu0 %v429, 18
      %v754 = vpop.permute.xlu0 %753
      %vm755 = vcmask 146432
      %v756 = vsel %vm755, %v752, %v754
      %vm757 = vcmp.ne.s16.totalorder %v752, 0
      %vm758 = vcmp.ne.s16.totalorder %v756, 0
      %vm759 = vcmp.ne.s16.totalorder %v754, 0
      %v760 = vsel %vm757, %v190, 0
      %v761 = vsel %vm758, %v185, 0
      %v762 = vsel %vm759, %v193, 0
      %s763 = scalar_lea.vmem %s1, 80
      %v764 = vld [vmem:[%s763] sm:$0xf]
      %v765 = vld [vmem:[%s763 + $0x4] sm:$0xf]
      %v766 = vld [vmem:[%s763 + $0x8] sm:$0xf]
      %v767 = vld [vmem:[%s763 + $0xc] sm:$0xf]
      %v772 = vunpack.c.l.b16 %v764
      %v773 = vunpack.c.l.b16 %v765
      %v774 = vunpack.c.l.b16 %v766
      %v775 = vunpack.c.l.b16 %v767
      %v776 = vpack.c.b16 %v773, %v772
      %v777 = vpack.c.b16 %v775, %v774
      %781 = vrot.lane.b32.xlu0 %v760, 110
      %v782 = vpop.permute.xlu0 %781
      %783 = vrot.lane.b32.xlu0 %v761, 110
      %v784 = vpop.permute.xlu0 %783
      %785 = vrot.lane.b32.xlu0 %v762, 110
      %v786 = vpop.permute.xlu0 %785
      %vm787 = vcmask 900096
      %v788 = vsel %vm787, %v782, %v784
      %v789 = vsel %vm787, %v784, %v786
      %v791 = vsel %vm272, %v776, 0
      %v794 = vsel %vm272, %v777, 0
      %v797 = vsel %vm279, %v788, 0
      %v800 = vsel %vm279, %v789, 0
      %802 = vmatprep.subr.bf16.mxu0 %v800
      %803 = vmatpush1.bf16.msra.mxu0 %v797
      %804 = vmatprep.subr.bf16.mxu0 0
      %805 = vmatpush1.bf16.msra.mxu0 0
      %806 = vmatprep.subr.bf16.mxu0 0
      %807 = vmatpush1.bf16.msra.mxu0 0
      %808 = vmatprep.subr.bf16.mxu0 0
      %809 = vmatpush1.bf16.msra.mxu0 0
      %810 = vmatprep.subr.bf16.mxu0 0
      %811 = vmatpush1.bf16.msra.mxu0 0
      %812 = vmatprep.subr.bf16.mxu0 0
      %813 = vmatpush1.bf16.msra.mxu0 0
      %814 = vmatprep.subr.bf16.mxu0 0
      %815 = vmatpush1.bf16.msra.mxu0 0
      %816 = vmatprep.subr.bf16.mxu0 0
      %817 = vmatpush1.bf16.msra.mxu0 0
      %818 = vmatprep.subr.bf16.mxu0 0
      %819 = vmatpush1.bf16.msra.mxu0 0
      %820 = vmatprep.subr.bf16.mxu0 0
      %821 = vmatpush1.bf16.msra.mxu0 0
      %822 = vmatprep.subr.bf16.mxu0 0
      %823 = vmatpush1.bf16.msra.mxu0 0
      %824 = vmatprep.subr.bf16.mxu0 0
      %825 = vmatpush1.bf16.msra.mxu0 0
      %826 = vmatprep.subr.bf16.mxu0 0
      %827 = vmatpush1.bf16.msra.mxu0 0
      %828 = vmatprep.subr.bf16.mxu0 0
      %829 = vmatpush1.bf16.msra.mxu0 0
      %830 = vmatprep.subr.bf16.mxu0 0
      %831 = vmatpush1.bf16.msra.mxu0 0
      %832 = vmatprep.subr.bf16.mxu0 0
      %833 = vmatpush1.bf16.msra.mxu0 0
      %834 = vmatprep.mubr.bf16.mxu0 0
      %835 = vmatmul.mubr.bf16.gmra.mrb[0].mxu0 %v791
      %v836 = vpop.f32.mrb[0].mxu0
      %v837 = vadd.f32 0.0, %v836
      %v838 = vpop.f32.mrb[0].mxu0
      %v839 = vadd.f32 0.0, %v838
      %v840 = vpop.f32.mrb[0].mxu0
      %v841 = vadd.f32 0.0, %v840
      %v842 = vpop.f32.mrb[0].mxu0
      %v843 = vadd.f32 0.0, %v842
      %844 = vmatprep.mubr.bf16.mxu0 0
      %845 = vmatmul.mubr.bf16.gmra.mrb[0].mxu0 %v794
      %v846 = vpop.f32.mrb[0].mxu0
      %v847 = vadd.f32 0.0, %v846
      %v848 = vpop.f32.mrb[0].mxu0
      %v849 = vadd.f32 0.0, %v848
      %v850 = vpop.f32.mrb[0].mxu0
      %v851 = vadd.f32 0.0, %v850
      %v852 = vpop.f32.mrb[0].mxu0
      %v853 = vadd.f32 0.0, %v852
      %854 = vdwg.mxu0
      %v855 = vadd.f32 %v743, %v837
      %v856 = vadd.f32 %v744, %v839
      %v857 = vadd.f32 %v745, %v841
      %v858 = vadd.f32 %v746, %v843
      %v859 = vadd.f32 %v747, %v847
      %v860 = vadd.f32 %v748, %v849
      %v861 = vadd.f32 %v749, %v851
      %v862 = vadd.f32 %v750, %v853
      %863 = vrot.lane.b32.xlu0 %v233, 32
      %v864 = vpop.permute.xlu0 %863
      %865 = vrot.lane.b32.xlu0 %v237, 32
      %v866 = vpop.permute.xlu0 %865
      %vm867 = vcmask 261120
      %v868 = vsel %vm867, %v864, %v866
      %vm869 = vcmp.ne.s16.totalorder %v864, 0
      %vm870 = vcmp.ne.s16.totalorder %v868, 0
      %vm871 = vcmp.ne.s16.totalorder %v866, 0
      %v872 = vsel %vm869, %v190, 0
      %v873 = vsel %vm870, %v185, 0
      %v874 = vsel %vm871, %v193, 0
      %s875 = scalar_lea.vmem %s1, 96
      %v876 = vld [vmem:[%s875] sm:$0xf]
      %v877 = vld [vmem:[%s875 + $0x4] sm:$0xf]
      %v878 = vld [vmem:[%s875 + $0x8] sm:$0xf]
      %v879 = vld [vmem:[%s875 + $0xc] sm:$0xf]
      %v884 = vunpack.c.l.b16 %v876
      %v885 = vunpack.c.l.b16 %v877
      %v886 = vunpack.c.l.b16 %v878
      %v887 = vunpack.c.l.b16 %v879
      %v888 = vpack.c.b16 %v885, %v884
      %v889 = vpack.c.b16 %v887, %v886
      %893 = vrot.lane.b32.xlu0 %v872, 96
      %v894 = vpop.permute.xlu0 %893
      %895 = vrot.lane.b32.xlu0 %v873, 96
      %v896 = vpop.permute.xlu0 %895
      %897 = vrot.lane.b32.xlu0 %v874, 96
      %v898 = vpop.permute.xlu0 %897
      %vm899 = vcmask 785408
      %v900 = vsel %vm899, %v894, %v896
      %v901 = vsel %vm899, %v896, %v898
      %v903 = vsel %vm272, %v888, 0
      %v906 = vsel %vm272, %v889, 0
      %v909 = vsel %vm279, %v900, 0
      %v912 = vsel %vm279, %v901, 0
      %914 = vmatprep.subr.bf16.mxu0 %v912
      %915 = vmatpush1.bf16.msra.mxu0 %v909
      %916 = vmatprep.subr.bf16.mxu0 0
      %917 = vmatpush1.bf16.msra.mxu0 0
      %918 = vmatprep.subr.bf16.mxu0 0
      %919 = vmatpush1.bf16.msra.mxu0 0
      %920 = vmatprep.subr.bf16.mxu0 0
      %921 = vmatpush1.bf16.msra.mxu0 0
      %922 = vmatprep.subr.bf16.mxu0 0
      %923 = vmatpush1.bf16.msra.mxu0 0
      %924 = vmatprep.subr.bf16.mxu0 0
      %925 = vmatpush1.bf16.msra.mxu0 0
      %926 = vmatprep.subr.bf16.mxu0 0
      %927 = vmatpush1.bf16.msra.mxu0 0
      %928 = vmatprep.subr.bf16.mxu0 0
      %929 = vmatpush1.bf16.msra.mxu0 0
      %930 = vmatprep.subr.bf16.mxu0 0
      %931 = vmatpush1.bf16.msra.mxu0 0
      %932 = vmatprep.subr.bf16.mxu0 0
      %933 = vmatpush1.bf16.msra.mxu0 0
      %934 = vmatprep.subr.bf16.mxu0 0
      %935 = vmatpush1.bf16.msra.mxu0 0
      %936 = vmatprep.subr.bf16.mxu0 0
      %937 = vmatpush1.bf16.msra.mxu0 0
      %938 = vmatprep.subr.bf16.mxu0 0
      %939 = vmatpush1.bf16.msra.mxu0 0
      %940 = vmatprep.subr.bf16.mxu0 0
      %941 = vmatpush1.bf16.msra.mxu0 0
      %942 = vmatprep.subr.bf16.mxu0 0
      %943 = vmatpush1.bf16.msra.mxu0 0
      %944 = vmatprep.subr.bf16.mxu0 0
      %945 = vmatpush1.bf16.msra.mxu0 0
      %946 = vmatprep.mubr.bf16.mxu0 0
      %947 = vmatmul.mubr.bf16.gmra.mrb[0].mxu0 %v903
      %v948 = vpop.f32.mrb[0].mxu0
      %v949 = vadd.f32 0.0, %v948
      %v950 = vpop.f32.mrb[0].mxu0
      %v951 = vadd.f32 0.0, %v950
      %v952 = vpop.f32.mrb[0].mxu0
      %v953 = vadd.f32 0.0, %v952
      %v954 = vpop.f32.mrb[0].mxu0
      %v955 = vadd.f32 0.0, %v954
      %956 = vmatprep.mubr.bf16.mxu0 0
      %957 = vmatmul.mubr.bf16.gmra.mrb[0].mxu0 %v906
      %v958 = vpop.f32.mrb[0].mxu0
      %v959 = vadd.f32 0.0, %v958
      %v960 = vpop.f32.mrb[0].mxu0
      %v961 = vadd.f32 0.0, %v960
      %v962 = vpop.f32.mrb[0].mxu0
      %v963 = vadd.f32 0.0, %v962
      %v964 = vpop.f32.mrb[0].mxu0
      %v965 = vadd.f32 0.0, %v964
      %966 = vdwg.mxu0
      %v967 = vadd.f32 %v855, %v949
      %v968 = vadd.f32 %v856, %v951
      %v969 = vadd.f32 %v857, %v953
      %v970 = vadd.f32 %v858, %v955
      %v971 = vadd.f32 %v859, %v959
      %v972 = vadd.f32 %v860, %v961
      %v973 = vadd.f32 %v861, %v963
      %v974 = vadd.f32 %v862, %v965
      %s975 = scalar_lea.vmem %s1, 112
      %v976 = vld [vmem:[%s975] sm:$0xf]
      %v977 = vld [vmem:[%s975 + $0x4] sm:$0xf]
      %v978 = vld [vmem:[%s975 + $0x8] sm:$0xf]
      %v979 = vld [vmem:[%s975 + $0xc] sm:$0xf]
      %v984 = vunpack.c.l.b16 %v976
      %v985 = vunpack.c.l.b16 %v977
      %v986 = vunpack.c.l.b16 %v978
      %v987 = vunpack.c.l.b16 %v979
      %v988 = vpack.c.b16 %v985, %v984
      %v989 = vpack.c.b16 %v987, %v986
      %990 = vrot.lane.b32.xlu0 %v190, 95
      %v991 = vpop.permute.xlu0 %990
      %992 = vrot.lane.b32.xlu0 %v185, 95
      %v993 = vpop.permute.xlu0 %992
      %994 = vrot.lane.b32.xlu0 %v193, 95
      %v995 = vpop.permute.xlu0 %994
      %vm996 = vcmask 777216
      %v997 = vsel %vm996, %v991, %v993
      %v998 = vsel %vm996, %v993, %v995
      %v1000 = vsel %vm272, %v988, 0
      %v1003 = vsel %vm272, %v989, 0
      %v1006 = vsel %vm279, %v997, 0
      %v1009 = vsel %vm279, %v998, 0
      %1011 = vmatprep.subr.bf16.mxu0 %v1009
      %1012 = vmatpush1.bf16.msra.mxu0 %v1006
      %1013 = vmatprep.subr.bf16.mxu0 0
      %1014 = vmatpush1.bf16.msra.mxu0 0
      %1015 = vmatprep.subr.bf16.mxu0 0
      %1016 = vmatpush1.bf16.msra.mxu0 0
      %1017 = vmatprep.subr.bf16.mxu0 0
      %1018 = vmatpush1.bf16.msra.mxu0 0
      %1019 = vmatprep.subr.bf16.mxu0 0
      %1020 = vmatpush1.bf16.msra.mxu0 0
      %1021 = vmatprep.subr.bf16.mxu0 0
      %1022 = vmatpush1.bf16.msra.mxu0 0
      %1023 = vmatprep.subr.bf16.mxu0 0
      %1024 = vmatpush1.bf16.msra.mxu0 0
      %1025 = vmatprep.subr.bf16.mxu0 0
      %1026 = vmatpush1.bf16.msra.mxu0 0
      %1027 = vmatprep.subr.bf16.mxu0 0
      %1028 = vmatpush1.bf16.msra.mxu0 0
      %1029 = vmatprep.subr.bf16.mxu0 0
      %1030 = vmatpush1.bf16.msra.mxu0 0
      %1031 = vmatprep.subr.bf16.mxu0 0
      %1032 = vmatpush1.bf16.msra.mxu0 0
      %1033 = vmatprep.subr.bf16.mxu0 0
      %1034 = vmatpush1.bf16.msra.mxu0 0
      %1035 = vmatprep.subr.bf16.mxu0 0
      %1036 = vmatpush1.bf16.msra.mxu0 0
      %1037 = vmatprep.subr.bf16.mxu0 0
      %1038 = vmatpush1.bf16.msra.mxu0 0
      %1039 = vmatprep.subr.bf16.mxu0 0
      %1040 = vmatpush1.bf16.msra.mxu0 0
      %1041 = vmatprep.subr.bf16.mxu0 0
      %1042 = vmatpush1.bf16.msra.mxu0 0
      %1043 = vmatprep.mubr.bf16.mxu0 0
      %1044 = vmatmul.mubr.bf16.gmra.mrb[0].mxu0 %v1000
      %v1045 = vpop.f32.mrb[0].mxu0
      %v1046 = vadd.f32 0.0, %v1045
      %v1047 = vpop.f32.mrb[0].mxu0
      %v1048 = vadd.f32 0.0, %v1047
      %v1049 = vpop.f32.mrb[0].mxu0
      %v1050 = vadd.f32 0.0, %v1049
      %v1051 = vpop.f32.mrb[0].mxu0
      %v1052 = vadd.f32 0.0, %v1051
      %1053 = vmatprep.mubr.bf16.mxu0 0
      %1054 = vmatmul.mubr.bf16.gmra.mrb[0].mxu0 %v1003
      %v1055 = vpop.f32.mrb[0].mxu0
      %v1056 = vadd.f32 0.0, %v1055
      %v1057 = vpop.f32.mrb[0].mxu0
      %v1058 = vadd.f32 0.0, %v1057
      %v1059 = vpop.f32.mrb[0].mxu0
      %v1060 = vadd.f32 0.0, %v1059
      %v1061 = vpop.f32.mrb[0].mxu0
      %v1062 = vadd.f32 0.0, %v1061
      %1063 = vdwg.mxu0
      %v1064 = vadd.f32 %v967, %v1046
      %v1065 = vadd.f32 %v968, %v1048
      %v1066 = vadd.f32 %v969, %v1050
      %v1067 = vadd.f32 %v970, %v1052
      %v1068 = vadd.f32 %v971, %v1056
      %v1069 = vadd.f32 %v972, %v1058
      %v1070 = vadd.f32 %v973, %v1060
      %v1071 = vadd.f32 %v974, %v1062
      %1072 = vrot.lane.b32.xlu0 %v425, 34
      %v1073 = vpop.permute.xlu0 %1072
      %1074 = vrot.lane.b32.xlu0 %v429, 34
      %v1075 = vpop.permute.xlu0 %1074
      %vm1076 = vcmask 277504
      %v1077 = vsel %vm1076, %v1073, %v1075
      %vm1078 = vcmp.ne.s16.totalorder %v1073, 0
      %vm1079 = vcmp.ne.s16.totalorder %v1077, 0
      %vm1080 = vcmp.ne.s16.totalorder %v1075, 0
      %v1081 = vsel %vm1078, %v190, 0
      %v1082 = vsel %vm1079, %v185, 0
      %v1083 = vsel %vm1080, %v193, 0
      %s1084 = scalar_lea.vmem %s1, 128
      %v1085 = vld [vmem:[%s1084] sm:$0xf]
      %v1086 = vld [vmem:[%s1084 + $0x4] sm:$0xf]
      %v1087 = vld [vmem:[%s1084 + $0x8] sm:$0xf]
      %v1088 = vld [vmem:[%s1084 + $0xc] sm:$0xf]
      %v1093 = vunpack.c.l.b16 %v1085
      %v1094 = vunpack.c.l.b16 %v1086
      %v1095 = vunpack.c.l.b16 %v1087
      %v1096 = vunpack.c.l.b16 %v1088
      %v1097 = vpack.c.b16 %v1094, %v1093
      %v1098 = vpack.c.b16 %v1096, %v1095
      %1102 = vrot.lane.b32.xlu0 %v1081, 94
      %v1103 = vpop.permute.xlu0 %1102
      %1104 = vrot.lane.b32.xlu0 %v1082, 94
      %v1105 = vpop.permute.xlu0 %1104
      %1106 = vrot.lane.b32.xlu0 %v1083, 94
      %v1107 = vpop.permute.xlu0 %1106
      %vm1108 = vcmask 769024
      %v1109 = vsel %vm1108, %v1103, %v1105
      %v1110 = vsel %vm1108, %v1105, %v1107
      %v1112 = vsel %vm272, %v1097, 0
      %v1115 = vsel %vm272, %v1098, 0
      %v1118 = vsel %vm279, %v1109, 0
      %v1121 = vsel %vm279, %v1110, 0
      %1123 = vmatprep.subr.bf16.mxu0 %v1121
      %1124 = vmatpush1.bf16.msra.mxu0 %v1118
      %1125 = vmatprep.subr.bf16.mxu0 0
      %1126 = vmatpush1.bf16.msra.mxu0 0
      %1127 = vmatprep.subr.bf16.mxu0 0
      %1128 = vmatpush1.bf16.msra.mxu0 0
      %1129 = vmatprep.subr.bf16.mxu0 0
      %1130 = vmatpush1.bf16.msra.mxu0 0
      %1131 = vmatprep.subr.bf16.mxu0 0
      %1132 = vmatpush1.bf16.msra.mxu0 0
      %1133 = vmatprep.subr.bf16.mxu0 0
      %1134 = vmatpush1.bf16.msra.mxu0 0
      %1135 = vmatprep.subr.bf16.mxu0 0
      %1136 = vmatpush1.bf16.msra.mxu0 0
      %1137 = vmatprep.subr.bf16.mxu0 0
      %1138 = vmatpush1.bf16.msra.mxu0 0
      %1139 = vmatprep.subr.bf16.mxu0 0
      %1140 = vmatpush1.bf16.msra.mxu0 0
      %1141 = vmatprep.subr.bf16.mxu0 0
      %1142 = vmatpush1.bf16.msra.mxu0 0
      %1143 = vmatprep.subr.bf16.mxu0 0
      %1144 = vmatpush1.bf16.msra.mxu0 0
      %1145 = vmatprep.subr.bf16.mxu0 0
      %1146 = vmatpush1.bf16.msra.mxu0 0
      %1147 = vmatprep.subr.bf16.mxu0 0
      %1148 = vmatpush1.bf16.msra.mxu0 0
      %1149 = vmatprep.subr.bf16.mxu0 0
      %1150 = vmatpush1.bf16.msra.mxu0 0
      %1151 = vmatprep.subr.bf16.mxu0 0
      %1152 = vmatpush1.bf16.msra.mxu0 0
      %1153 = vmatprep.subr.bf16.mxu0 0
      %1154 = vmatpush1.bf16.msra.mxu0 0
      %1155 = vmatprep.mubr.bf16.mxu0 0
      %1156 = vmatmul.mubr.bf16.gmra.mrb[0].mxu0 %v1112
      %v1157 = vpop.f32.mrb[0].mxu0
      %v1158 = vadd.f32 0.0, %v1157
      %v1159 = vpop.f32.mrb[0].mxu0
      %v1160 = vadd.f32 0.0, %v1159
      %v1161 = vpop.f32.mrb[0].mxu0
      %v1162 = vadd.f32 0.0, %v1161
      %v1163 = vpop.f32.mrb[0].mxu0
      %v1164 = vadd.f32 0.0, %v1163
      %1165 = vmatprep.mubr.bf16.mxu0 0
      %1166 = vmatmul.mubr.bf16.gmra.mrb[0].mxu0 %v1115
      %v1167 = vpop.f32.mrb[0].mxu0
      %v1168 = vadd.f32 0.0, %v1167
      %v1169 = vpop.f32.mrb[0].mxu0
      %v1170 = vadd.f32 0.0, %v1169
      %v1171 = vpop.f32.mrb[0].mxu0
      %v1172 = vadd.f32 0.0, %v1171
      %v1173 = vpop.f32.mrb[0].mxu0
      %v1174 = vadd.f32 0.0, %v1173
      %1175 = vdwg.mxu0
      %v1176 = vadd.f32 %v1064, %v1158
      %v1177 = vadd.f32 %v1065, %v1160
      %v1178 = vadd.f32 %v1066, %v1162
      %v1179 = vadd.f32 %v1067, %v1164
      %v1180 = vadd.f32 %v1068, %v1168
      %v1181 = vadd.f32 %v1069, %v1170
      %v1182 = vadd.f32 %v1070, %v1172
      %v1183 = vadd.f32 %v1071, %v1174
      %v1184 = vld [vmem:[%s2] sm:$0xff]
      %v1185 = vld [vmem:[%s2 + $0x8] sm:$0xff]
      %v1186 = vld [vmem:[%s2 + $0x10] sm:$0xff]
      %v1187 = vld [vmem:[%s2 + $0x18] sm:$0xff]
      %1189 = vset.pattern.permute.xlu0 0
      %1190 = vperm.xlu0 %1189, %v1184
      %v1191 = vpop.permute.xlu0 %1190
      %1194 = vset.pattern.permute.xlu0 0
      %1195 = vperm.xlu0 %1194, %v1185
      %v1196 = vpop.permute.xlu0 %1195
      %1199 = vset.pattern.permute.xlu0 0
      %1200 = vperm.xlu0 %1199, %v1186
      %v1201 = vpop.permute.xlu0 %1200
      %1204 = vset.pattern.permute.xlu0 0
      %1205 = vperm.xlu0 %1204, %v1187
      %v1206 = vpop.permute.xlu0 %1205
      %v1208 = vadd.f32 %v1176, %v1191
      %v1209 = vadd.f32 %v1177, %v1191
      %v1210 = vadd.f32 %v1178, %v1196
      %v1211 = vadd.f32 %v1179, %v1196
      %v1212 = vadd.f32 %v1180, %v1201
      %v1213 = vadd.f32 %v1181, %v1201
      %v1214 = vadd.f32 %v1182, %v1206
      %v1215 = vadd.f32 %v1183, %v1206
      %1216 = vst [vmem:[%s170] sm:$0xff] %v1208
      %1217 = vst [vmem:[%s170 + $0x8] sm:$0xff] %v1209
      %1218 = vst [vmem:[%s170 + $0x10] sm:$0xff] %v1210
      %1219 = vst [vmem:[%s170 + $0x18] sm:$0xff] %v1211
      %1220 = vst [vmem:[%s170 + $0x20] sm:$0xff] %v1212
      %1221 = vst [vmem:[%s170 + $0x28] sm:$0xff] %v1213
      %1222 = vst [vmem:[%s170 + $0x30] sm:$0xff] %v1214
      %1223 = vst [vmem:[%s170 + $0x38] sm:$0xff] %v1215
      %p1224 = scmp.lt.s32.totalorder %s14, 1
      %s1225 = scalar_select %p1224, %s14, 1
      %s1226 = smul.addr %s1225, 8
      %s1227 = smul.addr %s1226, 8
      %s1228 = scalar_lea.vmem %s3, %s1227
      // Predicated region
      $region33: #{upsample_forward.1} parent=31 // pred_check
        %p1229 = pneg %p100
      $region34: #{upsample_forward.1} parent=31 // pred_check_branch
        %1231 = sbr.rel (%p1229) target = $region36
      $region35: #{upsample_forward.1} parent=31 // pred_region
        _
      $region36: #{upsample_forward.1} parent=31 // pred_fallthru
        _
    $region32: #{upsample_forward.1} parent=5 // pred_fallthru
      _
    %p1232 = scmp.le.s32.totalorder 2, %s9
    // Predicated region
    $region37: #{upsample_forward.1} parent=5 // pred_check
      %p1233 = pneg %p1232
    $region38: #{upsample_forward.1} parent=5 // pred_check_branch
      %1235 = sbr.rel (%p1233) target = $region40
    $region39: #{upsample_forward.1} parent=5 // pred_region
      %s1236 = ssub.s32 %s9, 2
      // Predicated region
      $region41: #{upsample_forward.1} parent=39 // pred_check
        %p1237 = pneg %p106
      $region42: #{upsample_forward.1} parent=39 // pred_check_branch
        %1239 = sbr.rel (%p1237) target = $region44
      $region43: #{upsample_forward.1} parent=39 // pred_region
        %p1240 = scmp.lt.s32.totalorder %s15, 1
        %s1241 = scalar_select %p1240, %s15, 1
        %s1242 = smul.addr %s1241, 8
        %s1243 = smul.addr %s1242, 8
        %s1244 = scalar_lea.vmem %s3, %s1243
      $region44: #{upsample_forward.1} parent=39 // pred_fallthru
        _
    $region40: #{upsample_forward.1} parent=5 // pred_fallthru
      _
  $region6: #{upsample_forward.1} parent=0 // loop_footer
    %s13 = sadd.s32 1, %s9
  $region7: #{upsample_forward.1} parent=0 // loop_footer_branch
    %8 = sbr.rel target = $region3
  $region8: #{upsample_forward.1} parent=0 // loop_exit
    _

</llo_original>
